<compile_context>
chip_gen: v5e
topology: v5e:2x2
jax: 0.10.0
libtpu: 0.0.40
codegen_flags: <defaults>
</compile_context>

<pallas_src>
from functools import partial

import numpy as np
import jax
import jax.numpy as jnp
from jax.experimental import pallas as pl
from jax.experimental.pallas import tpu as pltpu

LAT_DIM = 2
N_CHANNELS = 2
N_FEATS = 5
SEED = 100


def init_weights():
    """Deterministic weights matching the PyTorch module's __init__.

    Returns:
      W      : (n_channels, n_feats, lat_dim) f32 — original layout (for reference).
      wt_all : (lat_dim, n_channels * n_feats) f32 — fused, pre-transposed
               weights used by the kernel (computed ONCE, not per call).
    """
    np.random.seed(SEED)
    ws = []
    for _ in range(N_CHANNELS):
        w = np.random.randint(-8, 8, size=(N_FEATS, LAT_DIM)).astype(np.float32)
        ws.append(w)
    W = np.stack(ws)                                   # (C, F, K)
    wt_all = np.concatenate([w.T for w in ws], axis=1)  # (K, C*F)
    return jnp.asarray(W), jnp.asarray(wt_all)


def _generator_fused_kernel(z_ref, wt_ref, o_ref):
    # z_ref : (batch, lat_dim)            -- whole array resident in VMEM
    # wt_ref: (lat_dim, n_ch * n_feats)   -- fused pre-transposed weights
    # o_ref : (batch, n_ch * n_feats)     -- lane-dense output slab
    z = z_ref[...]
    wt = wt_ref[...]
    lat_dim = z.shape[1]
    # K is tiny (=2): unrolled VPU broadcast-multiply-adds; avoids the MXU
    # vmatmul push + result-FIFO pop round trip entirely. All f32.
    acc = z[:, 0:1] * wt[0:1, :]
    for k in range(1, lat_dim):
        acc = acc + z[:, k:k + 1] * wt[k:k + 1, :]
    o_ref[...] = acc


@partial(jax.jit, static_argnums=(2, 3))
def _forward_fused(z, wt_all, n_channels, n_feats):
    batch = z.shape[0]
    out = pl.pallas_call(
        _generator_fused_kernel,
        out_shape=jax.ShapeDtypeStruct((batch, n_channels * n_feats), jnp.float32),
        # Single invocation (no grid): whole arrays as VMEM-resident blocks.
        in_specs=[
            pl.BlockSpec(memory_space=pltpu.MemorySpace.VMEM),
            pl.BlockSpec(memory_space=pltpu.MemorySpace.VMEM),
        ],
        out_specs=pl.BlockSpec(memory_space=pltpu.MemorySpace.VMEM),
    )(z, wt_all)
    # Split channels inside the jit: fused into the same XLA computation,
    # one host dispatch total.
    out3 = out.reshape(batch, n_channels, n_feats)
    return tuple(out3[:, c, :] for c in range(n_channels))


def generator_int_forward(z, wt_all, n_channels=N_CHANNELS, n_feats=N_FEATS):
    """z: (batch, lat_dim) f32; wt_all: (lat_dim, n_channels*n_feats) f32.

    Returns a list of n_channels arrays, each (batch, n_feats) f32,
    matching GeneratorInt.forward.
    """
    assert z.shape[1] == wt_all.shape[0], "z.size(1) must equal lat_dim"
    z = z.astype(jnp.float32)
    return list(_forward_fused(z, wt_all, n_channels, n_feats))


if __name__ == "__main__":
    key = jax.random.PRNGKey(0)
    batch = 8
    z = jax.random.normal(key, (batch, LAT_DIM), dtype=jnp.float32)

    W, wt_all = init_weights()  # W: (2, 5, 2); wt_all: (2, 10)

    obs = generator_int_forward(z, wt_all)
    obs = [jax.block_until_ready(o) for o in obs]

    # Verify against the plain-JAX reference of the PyTorch forward.
    for c in range(N_CHANNELS):
        ref = z @ W[c].T
        np.testing.assert_allclose(np.asarray(obs[c]), np.asarray(ref),
                                   rtol=1e-5, atol=1e-5)
        assert obs[c].shape == (batch, N_FEATS)
        assert obs[c].dtype == jnp.float32

    print("KERNEL_OK")
</pallas_src>

<mosaic_0001>
module attributes {stable_mosaic.version = 11 : i64} {
  func.func @_generator_fused_kernel(%arg0: memref<8x2xf32, #tpu.memory_space<vmem>>, %arg1: memref<2x10xf32, #tpu.memory_space<vmem>>, %arg2: memref<8x10xf32, #tpu.memory_space<vmem>>) attributes {dimension_semantics = [], scalar_prefetch = 0 : i64, scratch_operands = 0 : i64, tpu.core_type = #tpu.core_type<tc>} {
    %c0 = arith.constant 0 : index
    %c0_0 = arith.constant 0 : index
    %0 = vector.load %arg0[%c0, %c0_0] : memref<8x2xf32, #tpu.memory_space<vmem>>, vector<8x2xf32>
    %c0_1 = arith.constant 0 : index
    %c0_2 = arith.constant 0 : index
    %1 = vector.load %arg1[%c0_1, %c0_2] : memref<2x10xf32, #tpu.memory_space<vmem>>, vector<2x10xf32>
    %2 = vector.extract_strided_slice %0 {offsets = [0, 0], sizes = [8, 1], strides = [1, 1]} : vector<8x2xf32> to vector<8x1xf32>
    %3 = vector.extract_strided_slice %1 {offsets = [0, 0], sizes = [1, 10], strides = [1, 1]} : vector<2x10xf32> to vector<1x10xf32>
    %4 = vector.broadcast %2 : vector<8x1xf32> to vector<8x10xf32>
    %5 = vector.broadcast %3 : vector<1x10xf32> to vector<8x10xf32>
    %6 = arith.mulf %4, %5 : vector<8x10xf32>
    %7 = vector.extract_strided_slice %0 {offsets = [0, 1], sizes = [8, 1], strides = [1, 1]} : vector<8x2xf32> to vector<8x1xf32>
    %8 = vector.extract_strided_slice %1 {offsets = [1, 0], sizes = [1, 10], strides = [1, 1]} : vector<2x10xf32> to vector<1x10xf32>
    %9 = vector.broadcast %7 : vector<8x1xf32> to vector<8x10xf32>
    %10 = vector.broadcast %8 : vector<1x10xf32> to vector<8x10xf32>
    %11 = arith.mulf %9, %10 : vector<8x10xf32>
    %12 = arith.addf %6, %11 : vector<8x10xf32>
    %c0_3 = arith.constant 0 : index
    %c0_4 = arith.constant 0 : index
    %13 = vector.load %arg2[%c0_3, %c0_4] : memref<8x10xf32, #tpu.memory_space<vmem>>, vector<8x10xf32>
    tpu.vector_store %arg2[%c0_3, %c0_4], %12 {strides = array<i32>} : memref<8x10xf32, #tpu.memory_space<vmem>>, vector<8x10xf32>,
    return
  }
}

</mosaic_0001>

<llo_original>
// kernel: _forward_fused.1
$region0: #{_forward_fused.1}
  #allocation0 [shape = 'u32[]', space=smem, size = 0x4, offset = 0x4, fixed_abs, tag = 'smem constant byte address 0x4 - core index']
  #allocation1 [shape = 'u32[72,128]{1,0:T(1,128)}', space=vmem, size = 0x9000, scoped, tag = 'internal scratch']
  %s0 = inlined_call_operand.vmem [shape: f32[8,2], index: 0, kind: input, shape index: {}]
  %s1 = inlined_call_operand.vmem [shape: f32[2,10], index: 1, kind: input, shape index: {}]
  %s2 = inlined_call_operand.vmem [shape: f32[8,10], index: 2, kind: output, shape index: {}]
  %s3 = sld [smem:[#allocation0]]
  $region18: #{_forward_fused.1} parent=0
    _
  %s5 = ssub.s32 1, %s3
  %s6 = scalar_select 0, %s5, %s3
  // Predicated region
  $region2: #{_forward_fused.1} parent=0 // pred_check
    _
  $region3: #{_forward_fused.1} parent=0 // pred_check_branch
    %8 = sbr.rel (0) target = $region5
  $region4: #{_forward_fused.1} parent=0 // pred_region
    _
  $region5: #{_forward_fused.1} parent=0 // pred_fallthru
    _
  // Predicated region
  $region6: #{_forward_fused.1} parent=0 // pred_check
    _
  $region7: #{_forward_fused.1} parent=0 // pred_check_branch
    %10 = sbr.rel (0) target = $region9
  $region8: #{_forward_fused.1} parent=0 // pred_region
    _
  $region9: #{_forward_fused.1} parent=0 // pred_fallthru
    _
  %v11 = vld [vmem:[%s0] sm:$0xff]
  %v12 = vld [vmem:[%s1] sm:$0x3]
  %14 = vset.pattern.permute.xlu0 0
  %15 = vperm.xlu0 %14, %v11
  %v16 = vpop.permute.xlu0 %15
  %v18 = vperm.slane %v12, 0
  %v19 = vmul.f32 %v16, %v18
  %20 = vset.pattern.permute.xlu0 1
  %21 = vperm.xlu0 %20, %v11
  %v22 = vpop.permute.xlu0 %21
  %v24 = vperm.slane %v12, 1
  %v25 = vmul.f32 %v22, %v24
  %v26 = vadd.f32 %v19, %v25
  %vm27 = vcmask 80896
  %28 = vst.msk [vmem:[%s2] sm:$0xff] %vm27, %v26
  // Predicated region
  $region10: #{_forward_fused.1} parent=0 // pred_check
    _
  $region11: #{_forward_fused.1} parent=0 // pred_check_branch
    %30 = sbr.rel (0) target = $region13
  $region12: #{_forward_fused.1} parent=0 // pred_region
    _
  $region13: #{_forward_fused.1} parent=0 // pred_fallthru
    _
  // Predicated region
  $region14: #{_forward_fused.1} parent=0 // pred_check
    _
  $region15: #{_forward_fused.1} parent=0 // pred_check_branch
    %32 = sbr.rel (0) target = $region17
  $region16: #{_forward_fused.1} parent=0 // pred_region
    _
  $region17: #{_forward_fused.1} parent=0 // pred_fallthru
    _

</llo_original>
